<compile_context>
chip_gen: v7x
topology: tpu7x:2x2x1
jax: 0.10.0
libtpu: 0.0.40
codegen_flags: <defaults>
</compile_context>

<pallas_src>
import numpy as np
import jax
import jax.numpy as jnp
from jax.experimental import pallas as pl
from jax.experimental.pallas import tpu as pltpu


def _round_up(x, m):
    return ((x + m - 1) // m) * m


def _pick_tile_s(S, C_in, logits_itemsize, has_mask,
                 vmem_budget=32 * 1024 * 1024, max_tile=8192):
    """VMEM-aware spatial tile: biggest multiple of 128 that keeps the
    double-buffered input blocks + f32 intermediates inside the budget."""
    # HBM-streamed bytes per spatial lane (double-buffered blocks).
    stream = 2 * (C_in * logits_itemsize + 4 + (4 if has_mask else 0))
    # Rough allowance for live f32 intermediates (p, onehot, inter, union, ...).
    live = 8 * max(C_in, 2) * 4
    cap = max(128, vmem_budget // (stream + live))
    tile = min(cap, max_tile, _round_up(S, 128))
    return max(128, (tile // 128) * 128)


def _make_dice_kernel(C_out, sigmoid_path, has_mask, valid_upto, tile_s):
    """Build the per-(batch, spatial-tile) kernel.

    C_out       : number of probability channels (C, or 2 for the sigmoid path)
    sigmoid_path: True when the original logits had a single channel
    has_mask    : True when an explicit mask input is streamed
    valid_upto  : None, or S when padded lanes must be zeroed in-kernel
    """

    def kernel(*refs):
        if has_mask:
            logits_ref, target_ref, mask_ref, inter_ref, union_ref = refs
        else:
            logits_ref, target_ref, inter_ref, union_ref = refs
            mask_ref = None

        s = pl.program_id(1)

        @pl.when(s == 0)
        def _():
            inter_ref[...] = jnp.zeros_like(inter_ref)
            union_ref[...] = jnp.zeros_like(union_ref)

        x = logits_ref[0].astype(jnp.float32)     # (C_in, TS)  upcast in-kernel
        t = target_ref[0]                          # (1, TS) int32

        # class-index column; broadcasts against (1, TS) rows -> (C_out, TS)
        cls = jax.lax.broadcasted_iota(jnp.int32, (C_out, 1), 0)

        if sigmoid_path:
            # get_probability C==1 branch: pred = cat([1 - sigmoid, sigmoid])
            p1 = jax.nn.sigmoid(x)                              # (1, TS)
            p = jnp.where(cls == 1, p1, 1.0 - p1)               # (2, TS)
        else:
            # numerically stable softmax over the channel (sublane) axis
            mx = jnp.max(x, axis=0, keepdims=True)
            e = jnp.exp(x - mx)
            inv = pl.reciprocal(jnp.sum(e, axis=0, keepdims=True), approx=True)
            p = e * inv                                         # (C_out, TS)

        # scatter-free one-hot(target)
        onehot = (cls == t).astype(jnp.float32)                 # (C_out, TS)

        inter = p * onehot
        union = p + onehot

        if has_mask:
            m = mask_ref[0].astype(jnp.float32)                 # (1, TS)
            inter = inter * m
            union = union * m
        elif valid_upto is not None:
            # mask=None but the spatial axis was padded: zero the padded lanes
            lane = jax.lax.broadcasted_iota(jnp.int32, (1, tile_s), 1)
            valid = ((s * tile_s + lane) < valid_upto).astype(jnp.float32)
            inter = inter * valid
            union = union * valid

        inter_ref[...] += jnp.sum(inter, axis=1, keepdims=True).reshape(inter_ref.shape)
        union_ref[...] += jnp.sum(union, axis=1, keepdims=True).reshape(union_ref.shape)

    return kernel


def dice_loss(logits, target, mask=None, smooth=1e-5, tile_s=None,
              vmem_limit_bytes=48 * 1024 * 1024):
    """Matches Dice_Loss.forward: logits [N, C, *spatial], target [N, 1, *spatial]."""
    N, C_in = int(logits.shape[0]), int(logits.shape[1])
    S = int(np.prod(logits.shape[2:]))
    C_out = C_in if C_in > 1 else 2     # sigmoid path produces 2 channels

    logits = logits.reshape(N, C_in, S)          # keep native dtype
    target = target.reshape(N, 1, S)
    if target.dtype != jnp.int32:
        target = target.astype(jnp.int32)

    has_mask = mask is not None
    if has_mask:
        mask = mask.reshape(N, 1, S)
        if not jnp.issubdtype(mask.dtype, jnp.floating):
            mask = mask.astype(jnp.float32)

    if tile_s is None:
        tile_s = _pick_tile_s(S, C_in, logits.dtype.itemsize, has_mask)

    Sp = _round_up(S, tile_s)
    pad = Sp - S
    if pad:
        logits = jnp.pad(logits, ((0, 0), (0, 0), (0, pad)))
        target = jnp.pad(target, ((0, 0), (0, 0), (0, pad)))
        if has_mask:
            mask = jnp.pad(mask, ((0, 0), (0, 0), (0, pad)))

    valid_upto = S if (pad and not has_mask) else None
    kernel = _make_dice_kernel(C_out, sigmoid_path=(C_in == 1),
                               has_mask=has_mask, valid_upto=valid_upto,
                               tile_s=tile_s)

    in_specs = [pl.BlockSpec((1, C_in, tile_s), lambda n, s: (n, 0, s)),
                pl.BlockSpec((1, 1, tile_s), lambda n, s: (n, 0, s))]
    inputs = [logits, target]
    if has_mask:
        in_specs.append(pl.BlockSpec((1, 1, tile_s), lambda n, s: (n, 0, s)))
        inputs.append(mask)

    grid = (N, Sp // tile_s)
    inter, union = pl.pallas_call(
        kernel,
        out_shape=(jax.ShapeDtypeStruct((N, C_out, 1), jnp.float32),
                   jax.ShapeDtypeStruct((N, C_out, 1), jnp.float32)),
        grid_spec=pltpu.PrefetchScalarGridSpec(
            num_scalar_prefetch=0,
            grid=grid,
            in_specs=in_specs,
            out_specs=[pl.BlockSpec((1, C_out, 1), lambda n, s: (n, 0, 0)),
                       pl.BlockSpec((1, C_out, 1), lambda n, s: (n, 0, 0))],
        ),
        compiler_params=pltpu.CompilerParams(
            dimension_semantics=("parallel", "arbitrary"),
            vmem_limit_bytes=vmem_limit_bytes),
    )(*inputs)

    inter = inter[..., 0]                               # (N, C_out)
    union = union[..., 0]                               # (N, C_out)
    dice = (2.0 * inter + smooth) / (union + smooth)    # final scalar glue in JAX
    return 1.0 - jnp.mean(dice)


def _ref_dice(logits, target, mask, smooth):
    """Plain-JAX reference mirroring Dice_Loss.forward."""
    N, C = logits.shape[0], logits.shape[1]
    lg = logits.reshape(N, C, -1).astype(jnp.float32)
    tg = target.reshape(N, -1).astype(jnp.int32)
    if C > 1:
        p = jax.nn.softmax(lg, axis=1)
        nclass = C
    else:
        s1 = jax.nn.sigmoid(lg)
        p = jnp.concatenate([1.0 - s1, s1], axis=1)
        nclass = 2
    oh = jax.nn.one_hot(tg, nclass, axis=1, dtype=jnp.float32)
    inter = p * oh
    union = p + oh
    if mask is not None:
        m = mask.reshape(N, 1, -1).astype(jnp.float32)
        inter = inter * m
        union = union * m
    inter = inter.sum(-1)
    union = union.sum(-1)
    dice = (2.0 * inter + smooth) / (union + smooth)
    return 1.0 - jnp.mean(dice)


if __name__ == "__main__":
    key = jax.random.PRNGKey(0)
    k1, k2, k3, k4, k5 = jax.random.split(key, 5)
    smooth = 1e-5

    # Parameter from __init__ (nn.Parameter ones((1, nclass))) — deterministic
    # init; never used inside Dice_Loss.forward, matching PyTorch.
    class_weights = jnp.ones((1, 4), jnp.float32)

    # Case 1: multi-class softmax, mask=None, 128-aligned spatial.
    N, C, H, W = 2, 4, 16, 16
    logits1 = jax.random.normal(k1, (N, C, H, W), jnp.float32)
    target1 = jax.random.randint(k2, (N, 1, H, W), 0, C, jnp.int32)
    out1 = jax.block_until_ready(dice_loss(logits1, target1, smooth=smooth))
    ref1 = _ref_dice(logits1, target1, None, smooth)
    assert jnp.allclose(out1, ref1, atol=1e-3, rtol=1e-3), (out1, ref1)

    # Case 2: multi-class, mask=None, non-aligned spatial (in-kernel padding mask).
    H2, W2 = 10, 15
    logits2 = jax.random.normal(k3, (N, C, H2, W2), jnp.float32)
    target2 = jax.random.randint(k4, (N, 1, H2, W2), 0, C, jnp.int32)
    out2 = jax.block_until_ready(dice_loss(logits2, target2, smooth=smooth))
    ref2 = _ref_dice(logits2, target2, None, smooth)
    assert jnp.allclose(out2, ref2, atol=1e-3, rtol=1e-3), (out2, ref2)

    # Case 3: binary (C==1) sigmoid path with an explicit float mask.
    logits3 = jax.random.normal(k5, (N, 1, H, W), jnp.float32)
    target3 = jax.random.randint(k2, (N, 1, H, W), 0, 2, jnp.int32)
    mask3 = (jax.random.uniform(k1, (N, 1, H, W)) > 0.3).astype(jnp.float32)
    out3 = jax.block_until_ready(dice_loss(logits3, target3, mask=mask3, smooth=smooth))
    ref3 = _ref_dice(logits3, target3, mask3, smooth)
    assert jnp.allclose(out3, ref3, atol=1e-3, rtol=1e-3), (out3, ref3)

    print("KERNEL_OK")
</pallas_src>

<mosaic_0001>
module attributes {stable_mosaic.version = 11 : i64} {
  func.func @kernel(%arg0: i32, %arg1: i32, %arg2: memref<1x4x256xf32, #tpu.memory_space<vmem>>, %arg3: memref<1x1x256xi32, #tpu.memory_space<vmem>>, %arg4: memref<1x4x1xf32, #tpu.memory_space<vmem>>, %arg5: memref<1x4x1xf32, #tpu.memory_space<vmem>>) attributes {dimension_semantics = [#tpu.dimension_semantics<parallel>, #tpu.dimension_semantics<arbitrary>], iteration_bounds = array<i64: 2, 1>, scalar_prefetch = 0 : i64, scratch_operands = 0 : i64, tpu.core_type = #tpu.core_type<tc>, window_params = [{transform_indices = @transform_0, window_bounds = array<i64: 1, 4, 256>}, {transform_indices = @transform_1, window_bounds = array<i64: 1, 1, 256>}, {transform_indices = @transform_2, window_bounds = array<i64: 1, 4, 1>}, {transform_indices = @transform_3, window_bounds = array<i64: 1, 4, 1>}]} {
    %c0_i32 = arith.constant 0 : i32
    %0 = arith.cmpi eq, %arg1, %c0_i32 : i32
    %1 = arith.extui %0 : i1 to i32
    %c0_i32_0 = arith.constant 0 : i32
    %2 = arith.cmpi ne, %1, %c0_i32_0 : i32
    scf.if %2 {
      %cst_21 = arith.constant 0.000000e+00 : f32
      %37 = vector.broadcast %cst_21 : f32 to vector<1x4x1xf32>
      %c0_22 = arith.constant 0 : index
      %c0_23 = arith.constant 0 : index
      %c0_24 = arith.constant 0 : index
      %38 = vector.load %arg4[%c0_22, %c0_23, %c0_24] : memref<1x4x1xf32, #tpu.memory_space<vmem>>, vector<1x4x1xf32>
      tpu.vector_store %arg4[%c0_22, %c0_23, %c0_24], %37 {strides = array<i32>} : memref<1x4x1xf32, #tpu.memory_space<vmem>>, vector<1x4x1xf32>,
      %cst_25 = arith.constant 0.000000e+00 : f32
      %39 = vector.broadcast %cst_25 : f32 to vector<1x4x1xf32>
      %c0_26 = arith.constant 0 : index
      %c0_27 = arith.constant 0 : index
      %c0_28 = arith.constant 0 : index
      %40 = vector.load %arg5[%c0_26, %c0_27, %c0_28] : memref<1x4x1xf32, #tpu.memory_space<vmem>>, vector<1x4x1xf32>
      tpu.vector_store %arg5[%c0_26, %c0_27, %c0_28], %39 {strides = array<i32>} : memref<1x4x1xf32, #tpu.memory_space<vmem>>, vector<1x4x1xf32>,
    } else {
    }
    %c0 = arith.constant 0 : index
    %c0_1 = arith.constant 0 : index
    %c0_2 = arith.constant 0 : index
    %3 = vector.load %arg2[%c0, %c0_1, %c0_2] : memref<1x4x256xf32, #tpu.memory_space<vmem>>, vector<1x4x256xf32>
    %4 = vector.shape_cast %3 : vector<1x4x256xf32> to vector<4x256xf32>
    %c0_3 = arith.constant 0 : index
    %c0_4 = arith.constant 0 : index
    %c0_5 = arith.constant 0 : index
    %5 = vector.load %arg3[%c0_3, %c0_4, %c0_5] : memref<1x1x256xi32, #tpu.memory_space<vmem>>, vector<1x1x256xi32>
    %6 = vector.shape_cast %5 : vector<1x1x256xi32> to vector<1x256xi32>
    %7 = tpu.iota {dimensions = array<i32: 0>} : vector<4x1xi32>
    %cst = arith.constant dense<0xFF800000> : vector<256xf32>
    %8 = vector.multi_reduction <maximumf>, %4, %cst [0] : vector<4x256xf32> to vector<256xf32>
    %9 = vector.shape_cast %8 : vector<256xf32> to vector<1x256xf32>
    %10 = vector.broadcast %9 : vector<1x256xf32> to vector<4x256xf32>
    %11 = arith.subf %4, %10 : vector<4x256xf32>
    %12 = math.exp %11 : vector<4x256xf32>
    %cst_6 = arith.constant dense<0.000000e+00> : vector<256xf32>
    %13 = vector.multi_reduction <add>, %12, %cst_6 [0] : vector<4x256xf32> to vector<256xf32>
    %14 = vector.shape_cast %13 : vector<256xf32> to vector<1x256xf32>
    %15 = tpu.reciprocal %14 {approx = true} : vector<1x256xf32> -> vector<1x256xf32>
    %16 = vector.broadcast %15 : vector<1x256xf32> to vector<4x256xf32>
    %17 = arith.mulf %12, %16 : vector<4x256xf32>
    %18 = vector.broadcast %7 : vector<4x1xi32> to vector<4x256xi32>
    %19 = vector.broadcast %6 : vector<1x256xi32> to vector<4x256xi32>
    %20 = arith.cmpi eq, %18, %19 : vector<4x256xi32>
    %21 = arith.extui %20 : vector<4x256xi1> to vector<4x256xi32>
    %22 = arith.sitofp %21 : vector<4x256xi32> to vector<4x256xf32>
    %23 = arith.mulf %17, %22 : vector<4x256xf32>
    %24 = arith.addf %17, %22 : vector<4x256xf32>
    %c0_7 = arith.constant 0 : index
    %c0_8 = arith.constant 0 : index
    %c0_9 = arith.constant 0 : index
    %25 = vector.load %arg4[%c0_7, %c0_8, %c0_9] : memref<1x4x1xf32, #tpu.memory_space<vmem>>, vector<1x4x1xf32>
    %cst_10 = arith.constant dense<0.000000e+00> : vector<4xf32>
    %26 = vector.multi_reduction <add>, %23, %cst_10 [1] : vector<4x256xf32> to vector<4xf32>
    %27 = vector.shape_cast %26 : vector<4xf32> to vector<4x1xf32>
    %28 = vector.shape_cast %27 : vector<4x1xf32> to vector<1x4x1xf32>
    %29 = arith.addf %25, %28 : vector<1x4x1xf32>
    %c0_11 = arith.constant 0 : index
    %c0_12 = arith.constant 0 : index
    %c0_13 = arith.constant 0 : index
    %30 = vector.load %arg4[%c0_11, %c0_12, %c0_13] : memref<1x4x1xf32, #tpu.memory_space<vmem>>, vector<1x4x1xf32>
    tpu.vector_store %arg4[%c0_11, %c0_12, %c0_13], %29 {strides = array<i32>} : memref<1x4x1xf32, #tpu.memory_space<vmem>>, vector<1x4x1xf32>,
    %c0_14 = arith.constant 0 : index
    %c0_15 = arith.constant 0 : index
    %c0_16 = arith.constant 0 : index
    %31 = vector.load %arg5[%c0_14, %c0_15, %c0_16] : memref<1x4x1xf32, #tpu.memory_space<vmem>>, vector<1x4x1xf32>
    %cst_17 = arith.constant dense<0.000000e+00> : vector<4xf32>
    %32 = vector.multi_reduction <add>, %24, %cst_17 [1] : vector<4x256xf32> to vector<4xf32>
    %33 = vector.shape_cast %32 : vector<4xf32> to vector<4x1xf32>
    %34 = vector.shape_cast %33 : vector<4x1xf32> to vector<1x4x1xf32>
    %35 = arith.addf %31, %34 : vector<1x4x1xf32>
    %c0_18 = arith.constant 0 : index
    %c0_19 = arith.constant 0 : index
    %c0_20 = arith.constant 0 : index
    %36 = vector.load %arg5[%c0_18, %c0_19, %c0_20] : memref<1x4x1xf32, #tpu.memory_space<vmem>>, vector<1x4x1xf32>
    tpu.vector_store %arg5[%c0_18, %c0_19, %c0_20], %35 {strides = array<i32>} : memref<1x4x1xf32, #tpu.memory_space<vmem>>, vector<1x4x1xf32>,
    return
  }
  func.func @transform_0(%arg0: i32, %arg1: i32) -> (i32, i32, i32) {
    %c0_i32 = arith.constant 0 : i32
    %c0_i32_0 = arith.constant 0 : i32
    return %arg0, %c0_i32, %arg1 : i32, i32, i32
  }
  func.func @transform_1(%arg0: i32, %arg1: i32) -> (i32, i32, i32) {
    %c0_i32 = arith.constant 0 : i32
    %c0_i32_0 = arith.constant 0 : i32
    return %arg0, %c0_i32, %arg1 : i32, i32, i32
  }
  func.func @transform_2(%arg0: i32, %arg1: i32) -> (i32, i32, i32) {
    %c0_i32 = arith.constant 0 : i32
    %c0_i32_0 = arith.constant 0 : i32
    %c0_i32_1 = arith.constant 0 : i32
    return %arg0, %c0_i32, %c0_i32_0 : i32, i32, i32
  }
  func.func @transform_3(%arg0: i32, %arg1: i32) -> (i32, i32, i32) {
    %c0_i32 = arith.constant 0 : i32
    %c0_i32_0 = arith.constant 0 : i32
    %c0_i32_1 = arith.constant 0 : i32
    return %arg0, %c0_i32, %c0_i32_0 : i32, i32, i32
  }
}

</mosaic_0001>

<llo_original>
// kernel: tpu_custom_call.1
$region0: #{tpu_custom_call.1}
  #allocation0 [shape = 'u32[]', space=smem, size = 0x4, offset = 0x4, fixed_abs, tag = 'smem constant byte address 0x4 - core index']
  #allocation1 [shape = 'u32[144,128]{1,0:T(1,128)}', space=vmem, size = 0x12000, scoped, tag = 'internal scratch']
  %s0 = inlined_call_operand.hbm [shape: f32[2,4,256], index: 0, kind: input, shape index: {}]
  %s1 = inlined_call_operand.hbm [shape: s32[2,1,256], index: 1, kind: input, shape index: {}]
  %s2 = inlined_call_operand.vmem [shape: f32[2,4,1], index: 2, kind: output, shape index: {0}]
  %s3 = inlined_call_operand.vmem [shape: f32[2,4,1], index: 3, kind: output, shape index: {1}]
  %4 = xla_tuple %s2, %s3
  %s5 = sld [smem:[#allocation0]]
  $region61: #{tpu_custom_call.1} parent=0
    _
  %s7 = ssub.s32 1, %s5
  %s8 = scalar_select 0, %s7, %s5
  $region1: #{tpu_custom_call.1} parent=0
    #allocation2 [shape = 'u8[8192]{0}', space=vmem, size = 0x2000, scoped, tag = 'input window, operand 0']
    #allocation3 [shape = 's32[2]{0}', space=sflag, size = 0x8, scoped, tag = 'scoped memory for tpu_custom_call.1']
    #allocation4 [shape = 'u8[2048]{0}', space=vmem, size = 0x800, scoped, tag = 'input window, operand 1']
    #allocation5 [shape = 's32[2]{0}', space=sflag, size = 0x8, scoped, tag = 'scoped memory for tpu_custom_call.1']
    %9 = vsyncpa [#allocation3], 0
    %s10 = scalar_lea.sflag [#allocation3], 1
    %11 = vsyncpa %s10, 0
    %12 = vsyncpa [#allocation5], 0
    %s13 = scalar_lea.sflag [#allocation5], 1
    %14 = vsyncpa %s13, 0
    loop: start=0, step=1, limit=4
    $region2: #{tpu_custom_call.1} parent=1 // loop_pre_header
      _
    $region3: #{tpu_custom_call.1} parent=1 // loop_header
      %s16 = sphi 0, %s20
      %p17 = scmp.ge.s32.totalorder %s16, 4
      %s23 = sphi 0, %s35
      %s24 = sphi 0, %s31
      %s25 = sphi 0, %s23
      %s26 = sphi 0, %s24
      %s27 = sphi 0, %s25
      %s28 = sphi 0, %s26
      %s40 = sphi 0, %s42
      %s43 = sphi 0, %s40
      %s44 = sphi 0, %s43
      %s60 = sphi 0, %s44
      %s68 = sphi 0, %s70
      %s71 = sphi 0, %s68
      %s72 = sphi 0, %s71
      %s88 = sphi 0, %s72
      %s94 = sphi 0, %s96
      %s97 = sphi 0, %s94
      %s98 = sphi 0, %s97
      %s114 = sphi 0, %s98
      %s120 = sphi 0, %s122
      %s123 = sphi 0, %s120
      %s124 = sphi 0, %s123
      %s140 = sphi 0, %s124
    $region4: #{tpu_custom_call.1} parent=1 // loop_header_branch
      %19 = sbr.rel (%p17) target = $region8
    $region5: #{tpu_custom_call.1} parent=1 // loop_body
      %s21 = ssub.s32 %s16, 1
      %s22 = ssub.s32 %s16, 2
      %s29 = sadd.s32 1, %s24
      %p30 = scmp.ge.s32.totalorder %s29, 1
      %s31 = scalar_select %p30, 0, %s29
      %s32 = sadd.s32 1, %s23
      %s33 = scalar_select %p30, %s32, %s23
      %p34 = scmp.ge.s32.totalorder %s33, 2
      %s35 = scalar_select %p34, 0, %s33
      %s36 = ssub.s32 %s23, %s35
      %s37 = ssub.s32 %s24, %s31
      %s38 = sor.u32 %s36, %s37
      %p39 = scmp.eq.s32.totalorder %s38, 0
      %s41 = sadd.s32 %s40, 1
      %s42 = scalar_select %p39, %s40, %s41
      %p45 = pneg %p39
      %p46 = scmp.eq.s32.totalorder %s16, 1
      %p47 = por %p45, %p46
      %p48 = scmp.ne.s32.totalorder %s40, %s43
      %p49 = scmp.eq.s32.totalorder %s16, 0
      %p50 = por %p48, %p49
      %p51 = scmp.ne.s32.totalorder %s40, %s43
      %p52 = scmp.eq.s32.totalorder %s21, 1
      %p53 = por %p51, %p52
      %p54 = scmp.ne.s32.totalorder %s43, %s44
      %p55 = scmp.eq.s32.totalorder %s21, 0
      %p56 = por %p54, %p55
      %p57 = scmp.ne.s32.totalorder %s43, %s44
      %p58 = scmp.eq.s32.totalorder %s22, 1
      %p59 = por %p57, %p58
      %p61 = scmp.ne.s32.totalorder %s44, %s60
      %p62 = scmp.eq.s32.totalorder %s22, 0
      %p63 = por %p61, %p62
      %s64 = ssub.s32 %s23, %s35
      %s65 = ssub.s32 %s24, %s31
      %s66 = sor.u32 %s64, %s65
      %p67 = scmp.eq.s32.totalorder %s66, 0
      %s69 = sadd.s32 %s68, 1
      %s70 = scalar_select %p67, %s68, %s69
      %p73 = pneg %p67
      %p74 = scmp.eq.s32.totalorder %s16, 1
      %p75 = por %p73, %p74
      %p76 = scmp.ne.s32.totalorder %s68, %s71
      %p77 = scmp.eq.s32.totalorder %s16, 0
      %p78 = por %p76, %p77
      %p79 = scmp.ne.s32.totalorder %s68, %s71
      %p80 = scmp.eq.s32.totalorder %s21, 1
      %p81 = por %p79, %p80
      %p82 = scmp.ne.s32.totalorder %s71, %s72
      %p83 = scmp.eq.s32.totalorder %s21, 0
      %p84 = por %p82, %p83
      %p85 = scmp.ne.s32.totalorder %s71, %s72
      %p86 = scmp.eq.s32.totalorder %s22, 1
      %p87 = por %p85, %p86
      %p89 = scmp.ne.s32.totalorder %s72, %s88
      %p90 = scmp.eq.s32.totalorder %s22, 0
      %p91 = por %p89, %p90
      %s92 = ssub.s32 %s23, %s35
      %p93 = scmp.eq.s32.totalorder %s92, 0
      %s95 = sadd.s32 %s94, 1
      %s96 = scalar_select %p93, %s94, %s95
      %p99 = pneg %p93
      %p100 = scmp.eq.s32.totalorder %s16, 1
      %p101 = por %p99, %p100
      %p102 = scmp.ne.s32.totalorder %s94, %s97
      %p103 = scmp.eq.s32.totalorder %s16, 0
      %p104 = por %p102, %p103
      %p105 = scmp.ne.s32.totalorder %s94, %s97
      %p106 = scmp.eq.s32.totalorder %s21, 1
      %p107 = por %p105, %p106
      %p108 = scmp.ne.s32.totalorder %s97, %s98
      %p109 = scmp.eq.s32.totalorder %s21, 0
      %p110 = por %p108, %p109
      %p111 = scmp.ne.s32.totalorder %s97, %s98
      %p112 = scmp.eq.s32.totalorder %s22, 1
      %p113 = por %p111, %p112
      %p115 = scmp.ne.s32.totalorder %s98, %s114
      %p116 = scmp.eq.s32.totalorder %s22, 0
      %p117 = por %p115, %p116
      %s118 = ssub.s32 %s23, %s35
      %p119 = scmp.eq.s32.totalorder %s118, 0
      %s121 = sadd.s32 %s120, 1
      %s122 = scalar_select %p119, %s120, %s121
      %p125 = pneg %p119
      %p126 = scmp.eq.s32.totalorder %s16, 1
      %p127 = por %p125, %p126
      %p128 = scmp.ne.s32.totalorder %s120, %s123
      %p129 = scmp.eq.s32.totalorder %s16, 0
      %p130 = por %p128, %p129
      %p131 = scmp.ne.s32.totalorder %s120, %s123
      %p132 = scmp.eq.s32.totalorder %s21, 1
      %p133 = por %p131, %p132
      %p134 = scmp.ne.s32.totalorder %s123, %s124
      %p135 = scmp.eq.s32.totalorder %s21, 0
      %p136 = por %p134, %p135
      %p137 = scmp.ne.s32.totalorder %s123, %s124
      %p138 = scmp.eq.s32.totalorder %s22, 1
      %p139 = por %p137, %p138
      %p141 = scmp.ne.s32.totalorder %s124, %s140
      %p142 = scmp.eq.s32.totalorder %s22, 0
      %p143 = por %p141, %p142
      %p144 = scmp.le.s32.totalorder 1, %s16
      %p145 = scmp.lt.s32.totalorder %s16, 3
      %p146 = pnand %p144, %p145
      %p147 = pneg %p146
      // Predicated region
      $region9: #{tpu_custom_call.1} parent=5 // pred_check
        _
      $region10: #{tpu_custom_call.1} parent=5 // pred_check_branch
        %149 = sbr.rel (%p146) target = $region12
      $region11: #{tpu_custom_call.1} parent=5 // pred_region
        %s150 = ssub.s32 %s16, 1
      $region12: #{tpu_custom_call.1} parent=5 // pred_fallthru
        _
      %p151 = scmp.lt.s32.totalorder %s16, 2
      // Predicated region
      $region13: #{tpu_custom_call.1} parent=5 // pred_check
        %p152 = pneg %p151
      $region14: #{tpu_custom_call.1} parent=5 // pred_check_branch
        %154 = sbr.rel (%p152) target = $region16
      $region15: #{tpu_custom_call.1} parent=5 // pred_region
        // Predicated region
        $region17: #{tpu_custom_call.1} parent=15 // pred_check
          %p155 = pneg %p50
        $region18: #{tpu_custom_call.1} parent=15 // pred_check_branch
          %157 = sbr.rel (%p155) target = $region20
        $region19: #{tpu_custom_call.1} parent=15 // pred_region
          %s158 = sand.u32 %s40, 1
          %s159 = scalar_lea.sflag [#allocation3], %s158
          %s160 = sand.u32 %s40, 1
          %s161 = smul.addr %s160, 8
          %s162 = scalar_lea.vmem [#allocation2], %s161
          %s163 = smul.u32 2, %s24
          %s165 = ssub.s32 128, 128
          %166 = vsyncadd %s159, %s165
          %s167 = smul.addr %s23, 2
          %s168 = sadd.s32 %s163, %s167
          %s169 = smul.addr %s168, 64
          %s170 = scalar_lea.hbm %s0, %s169
          %s172 = sshll.u32 %s162, 4
          %s173 = int_to_ptr.vmem [resolvable:$true] %s172
          %175 = dma.hbm_to_vmem [thread:$0]  %s170, 128, %s173, %s159
        $region20: #{tpu_custom_call.1} parent=15 // pred_fallthru
          _
        // Predicated region
        $region21: #{tpu_custom_call.1} parent=15 // pred_check
          %p176 = pneg %p78
        $region22: #{tpu_custom_call.1} parent=15 // pred_check_branch
          %178 = sbr.rel (%p176) target = $region24
        $region23: #{tpu_custom_call.1} parent=15 // pred_region
          %s179 = sand.u32 %s68, 1
          %s180 = scalar_lea.sflag [#allocation5], %s179
          %s181 = sand.u32 %s68, 1
          %s182 = smul.addr %s181, 2
          %s183 = scalar_lea.vmem [#allocation4], %s182
          %s184 = smul.u32 2, %s24
          %s186 = ssub.s32 32, 32
          %187 = vsyncadd %s180, %s186
          %s188 = smul.addr %s23, 2
          %s189 = sadd.s32 %s184, %s188
          %s190 = smul.addr %s189, 16
          %s191 = scalar_lea.hbm %s1, %s190
          %s193 = sshll.u32 %s183, 4
          %s194 = int_to_ptr.vmem [resolvable:$true] %s193
          %196 = dma.hbm_to_vmem [thread:$0]  %s191, 32, %s194, %s180
        $region24: #{tpu_custom_call.1} parent=15 // pred_fallthru
          _
      $region16: #{tpu_custom_call.1} parent=5 // pred_fallthru
        _
      %p197 = scmp.le.s32.totalorder 1, %s16
      %p198 = scmp.lt.s32.totalorder %s16, 3
      %p199 = pnand %p197, %p198
      %p200 = pneg %p199
      // Predicated region
      $region25: #{tpu_custom_call.1} parent=5 // pred_check
        _
      $region26: #{tpu_custom_call.1} parent=5 // pred_check_branch
        %202 = sbr.rel (%p199) target = $region28
      $region27: #{tpu_custom_call.1} parent=5 // pred_region
        %s203 = ssub.s32 %s16, 1
        %s204 = sand.u32 %s43, 1
        %s205 = scalar_lea.sflag [#allocation3], %s204
        %s206 = sand.u32 %s43, 1
        %s207 = smul.addr %s206, 8
        %s208 = scalar_lea.vmem [#allocation2], %s207
        // Predicated region
        $region29: #{tpu_custom_call.1} parent=27 // pred_check
          %p209 = pneg %p56
        $region30: #{tpu_custom_call.1} parent=27 // pred_check_branch
          %211 = sbr.rel (%p209) target = $region32
        $region31: #{tpu_custom_call.1} parent=27 // pred_region
          %212 = dma.done %s205, 128
        $region32: #{tpu_custom_call.1} parent=27 // pred_fallthru
          _
        %s213 = sand.u32 %s71, 1
        %s214 = scalar_lea.sflag [#allocation5], %s213
        %s215 = sand.u32 %s71, 1
        %s216 = smul.addr %s215, 2
        %s217 = scalar_lea.vmem [#allocation4], %s216
        // Predicated region
        $region33: #{tpu_custom_call.1} parent=27 // pred_check
          %p218 = pneg %p84
        $region34: #{tpu_custom_call.1} parent=27 // pred_check_branch
          %220 = sbr.rel (%p218) target = $region36
        $region35: #{tpu_custom_call.1} parent=27 // pred_region
          %221 = dma.done %s214, 32
        $region36: #{tpu_custom_call.1} parent=27 // pred_fallthru
          _
        %s222 = sand.u32 %s43, 1
        %s223 = scalar_lea.sflag [#allocation3], %s222
        %s224 = sand.u32 %s43, 1
        %s225 = smul.addr %s224, 8
        %s226 = scalar_lea.vmem [#allocation2], %s225
        %p227 = pneg %p56
        %p228 = pneg %p53
        %s229 = sand.u32 %s71, 1
        %s230 = scalar_lea.sflag [#allocation5], %s229
        %s231 = sand.u32 %s71, 1
        %s232 = smul.addr %s231, 2
        %s233 = scalar_lea.vmem [#allocation4], %s232
        %p234 = pneg %p84
        %p235 = pneg %p81
        %p236 = pneg %p110
        %p237 = pneg %p107
        %p238 = scmp.lt.s32.totalorder %s25, 1
        %s239 = scalar_select %p238, %s25, 1
        %s240 = smul.addr %s239, 4
        %s241 = scalar_lea.vmem %s2, %s240
        %p242 = pneg %p136
        %p243 = pneg %p133
        %p244 = scmp.lt.s32.totalorder %s25, 1
        %s245 = scalar_select %p244, %s25, 1
        %s246 = smul.addr %s245, 4
        %s247 = scalar_lea.vmem %s3, %s246
        %s248 = smul.u32 2, %s26
        %s249 = smul.u32 2, %s26
        %p250 = scmp.lt.s32.totalorder %s25, 1
        %s251 = scalar_select %p250, %s25, 1
        %s252 = smul.addr %s251, 4
        %s253 = scalar_lea.vmem %s2, %s252
        %p254 = scmp.lt.s32.totalorder %s25, 1
        %s255 = scalar_select %p254, %s25, 1
        %s256 = smul.addr %s255, 4
        %s257 = scalar_lea.vmem %s3, %s256
        %p258 = scmp.eq.s32.totalorder %s26, 0
        // Predicated region
        $region37: #{tpu_custom_call.1} parent=27 // pred_check
          %p259 = pneg %p258
        $region38: #{tpu_custom_call.1} parent=27 // pred_check_branch
          %261 = sbr.rel (%p259) target = $region40
        $region39: #{tpu_custom_call.1} parent=27 // pred_region
          %vm262 = vcmask 3072
          %263 = vst.msk [vmem:[%s253] sm:$0xf] %vm262, 0.0
          %264 = vst.msk [vmem:[%s257] sm:$0xf] %vm262, 0.0
        $region40: #{tpu_custom_call.1} parent=27 // pred_fallthru
          _
        %v265 = vld [vmem:[%s208] sm:$0xff]
        %v266 = vld [vmem:[%s217] sm:$0x3]
        %v267 = vlaneseq
        %v268 = vshrl.u32 %v267, 7
        %v270 = vcombine.high %v265, %v265
        %vm272 = vcmask 1043456
        %v273 = vsel %vm272, %v265, -inf
        %v274 = vrot.slane %v273, 4
        %v275 = vmax.f32 %v273, %v274
        %v276 = vrot.slane %v275, 2
        %v277 = vmax.f32 %v275, %v276
        %v278 = vrot.slane %v277, 1
        %v279 = vmax.f32 %v277, %v278
        %v280 = vsel %vm272, %v270, -inf
        %v281 = vrot.slane %v280, 4
        %v282 = vmax.f32 %v280, %v281
        %v283 = vrot.slane %v282, 2
        %v284 = vmax.f32 %v282, %v283
        %v285 = vrot.slane %v284, 1
        %v286 = vmax.f32 %v284, %v285
        %v289 = vcombine.low %v279, %v286
        %v291 = vsub.f32 %v265, %v289
        %v292 = vmul.f32 %v291, 1.442695
        %v293 = vpow.pop %v292
        %v295 = vcombine.high %v293, %v293
        %v297 = vsel %vm272, %v293, 0.0
        %v298 = vrot.slane %v297, 4
        %v299 = vadd.f32 %v297, %v298
        %v300 = vrot.slane %v299, 2
        %v301 = vadd.f32 %v299, %v300
        %v302 = vrot.slane %v301, 1
        %v303 = vadd.f32 %v301, %v302
        %v304 = vsel %vm272, %v295, 0.0
        %v305 = vrot.slane %v304, 4
        %v306 = vadd.f32 %v304, %v305
        %v307 = vrot.slane %v306, 2
        %v308 = vadd.f32 %v306, %v307
        %v309 = vrot.slane %v308, 1
        %v310 = vadd.f32 %v308, %v309
        %v311 = vrcp.pop %v303
        %v312 = vrcp.pop %v310
        %v315 = vcombine.low %v311, %v312
        %v317 = vmul.f32 %v293, %v315
        %v318 = vlaneseq
        %v319 = vshrl.u32 %v318, 7
        %v320 = vsub.s32 0, %v319
        %v321 = vrot.slane %v266, %v320
        %v322 = vlaneseq
        %v323 = vshrl.u32 %v322, 7
        %v324 = vsub.s32 1, %v323
        %v325 = vrot.slane %v266, %v324
        %vm326 = vcmp.eq.s32.totalorder %v268, %v321
        %vm327 = vcmp.eq.s32.totalorder %v268, %v325
        %v328 = vsel %vm326, 1, 0
        %v329 = vsel %vm327, 1, 0
        %v330 = vcvt.s32.f32 %v328
        %v331 = vcvt.s32.f32 %v329
        %v334 = vcombine.low %v330, %v331
        %v336 = vmul.f32 %v317, %v334
        %v337 = vadd.f32 %v317, %v334
        %v338 = vld [vmem:[%s253] sm:$0xf]
        %v340 = vcombine.high %v336, %v336
        %v342 = vsel %vm272, %v336, 0.0
        %v343 = vsel %vm272, %v340, 0.0
        %v344 = vadd.f32 %v342, %v343
        %345 = vadd.xlane.f32.xlu0 %v344
        %v346 = vpop.xlane.xlu0 %345
        %v347 = vadd.f32 %v338, %v346
        %vm348 = vcmask 3072
        %349 = vst.msk [vmem:[%s253] sm:$0xf] %vm348, %v347
        %v350 = vld [vmem:[%s257] sm:$0xf]
        %v352 = vcombine.high %v337, %v337
        %v354 = vsel %vm272, %v337, 0.0
        %v355 = vsel %vm272, %v352, 0.0
        %v356 = vadd.f32 %v354, %v355
        %357 = vadd.xlane.f32.xlu0 %v356
        %v358 = vpop.xlane.xlu0 %357
        %v359 = vadd.f32 %v350, %v358
        %360 = vst.msk [vmem:[%s257] sm:$0xf] %vm348, %v359
        %p361 = scmp.lt.s32.totalorder %s25, 1
        %s362 = scalar_select %p361, %s25, 1
        %s363 = smul.addr %s362, 4
        %s364 = scalar_lea.vmem %s2, %s363
        %p365 = scmp.lt.s32.totalorder %s25, 1
        %s366 = scalar_select %p365, %s25, 1
        %s367 = smul.addr %s366, 4
        %s368 = scalar_lea.vmem %s3, %s367
        // Predicated region
        $region41: #{tpu_custom_call.1} parent=27 // pred_check
          %p369 = pneg %p107
        $region42: #{tpu_custom_call.1} parent=27 // pred_check_branch
          %371 = sbr.rel (%p369) target = $region44
        $region43: #{tpu_custom_call.1} parent=27 // pred_region
          _
        $region44: #{tpu_custom_call.1} parent=27 // pred_fallthru
          _
        // Predicated region
        $region45: #{tpu_custom_call.1} parent=27 // pred_check
          %p372 = pneg %p133
        $region46: #{tpu_custom_call.1} parent=27 // pred_check_branch
          %374 = sbr.rel (%p372) target = $region48
        $region47: #{tpu_custom_call.1} parent=27 // pred_region
          _
        $region48: #{tpu_custom_call.1} parent=27 // pred_fallthru
          _
      $region28: #{tpu_custom_call.1} parent=5 // pred_fallthru
        _
      %p375 = scmp.le.s32.totalorder 2, %s16
      // Predicated region
      $region49: #{tpu_custom_call.1} parent=5 // pred_check
        %p376 = pneg %p375
      $region50: #{tpu_custom_call.1} parent=5 // pred_check_branch
        %378 = sbr.rel (%p376) target = $region52
      $region51: #{tpu_custom_call.1} parent=5 // pred_region
        %s379 = ssub.s32 %s16, 2
        // Predicated region
        $region53: #{tpu_custom_call.1} parent=51 // pred_check
          %p380 = pneg %p113
        $region54: #{tpu_custom_call.1} parent=51 // pred_check_branch
          %382 = sbr.rel (%p380) target = $region56
        $region55: #{tpu_custom_call.1} parent=51 // pred_region
          %p383 = scmp.lt.s32.totalorder %s27, 1
          %s384 = scalar_select %p383, %s27, 1
          %s385 = smul.addr %s384, 4
          %s386 = scalar_lea.vmem %s2, %s385
        $region56: #{tpu_custom_call.1} parent=51 // pred_fallthru
          _
        // Predicated region
        $region57: #{tpu_custom_call.1} parent=51 // pred_check
          %p387 = pneg %p139
        $region58: #{tpu_custom_call.1} parent=51 // pred_check_branch
          %389 = sbr.rel (%p387) target = $region60
        $region59: #{tpu_custom_call.1} parent=51 // pred_region
          %p390 = scmp.lt.s32.totalorder %s27, 1
          %s391 = scalar_select %p390, %s27, 1
          %s392 = smul.addr %s391, 4
          %s393 = scalar_lea.vmem %s3, %s392
        $region60: #{tpu_custom_call.1} parent=51 // pred_fallthru
          _
      $region52: #{tpu_custom_call.1} parent=5 // pred_fallthru
        _
    $region6: #{tpu_custom_call.1} parent=1 // loop_footer
      %s20 = sadd.s32 1, %s16
    $region7: #{tpu_custom_call.1} parent=1 // loop_footer_branch
      %15 = sbr.rel target = $region3
    $region8: #{tpu_custom_call.1} parent=1 // loop_exit
      _
    %394 = vsyncpa [#allocation3], 1
    %s395 = scalar_lea.sflag [#allocation3], 1
    %396 = vsyncpa %s395, 1
    %397 = vsyncpa [#allocation5], 1
    %s398 = scalar_lea.sflag [#allocation5], 1
    %399 = vsyncpa %s398, 1

</llo_original>
